<compile_context>
chip_gen: v5e
topology: v5e:2x2
jax: 0.10.0
libtpu: 0.0.40
codegen_flags: <defaults>
</compile_context>

<pallas_src>
import functools

import jax
import jax.numpy as jnp
from jax.experimental import pallas as pl
from jax.experimental.pallas import tpu as pltpu

SUBLANE = 8         # f32 sublane tile
BF16_SUBLANE = 16   # bf16 packed sublane tile
LANE = 128          # lane tile


def lstm_fc_kernel(x_ref, w_ref, b_ref, o_ref, *, T, Bp, H, Ip):
    """Single-program kernel: full LSTM recurrence over T steps + final Linear.

    x_ref : (T*Bp, Ip)   bf16  time-major flat input (batch padded to 8, feat to 16)
    w_ref : (Ip+2H, 4H)  bf16  rows [0:Ip]=W_ih^T (g cols x2), [Ip:Ip+H]=W_hh^T
                               (g cols x2), [Ip+H:Ip+2H]=fc.weight^T (lane-padded)
    b_ref : (2, 4H)      f32   row 0 = b_ih+b_hh (g cols x2), row 1 = fc.bias padded
    o_ref : (Bp, 4H)     f32   lane-dense padded output
    """
    # Static slices of the fused weight buffer; every segment offset is a multiple
    # of the bf16 (16, 128) packing tile, so no relayout copies.
    wih = w_ref[0:Ip, :]
    whh = w_ref[Ip:Ip + H, :]
    wfc = w_ref[Ip + H:Ip + 2 * H, :]
    b_lstm = b_ref[0:1, :]
    b_fc = b_ref[1:2, :]

    # Hoisted input projection: one bf16 MXU call covers all T timesteps; kept flat
    # (T*Bp, 4H) so every per-step slice below is exactly one (8,128) f32 tile.
    xw_all = (jnp.dot(x_ref[...], wih, preferred_element_type=jnp.float32)
              + b_lstm)

    h = jnp.zeros((Bp, H), jnp.float32)
    c = jnp.zeros((Bp, H), jnp.float32)

    # Fully unrolled recurrence (T is small and static): full scheduler visibility.
    # TODO(synk): W_hh could be staged in the MXU across steps via
    # pltpu.matmul_push_rhs / matmul_acc_lhs / matmul_pop (MRB in-place accumulate
    # on v7x); kept as jnp.dot for lowering robustness.
    for t in range(T):
        gates = xw_all[t * Bp:(t + 1) * Bp, :] + jnp.dot(
            h.astype(jnp.bfloat16), whh, preferred_element_type=jnp.float32)
        # One full-width EUP pass; the g gate is recovered via
        # tanh(z) = 2*sigmoid(2z) - 1 (its weight/bias columns were pre-scaled by 2).
        sig = jax.nn.sigmoid(gates)
        i_g = sig[:, 0 * H:1 * H]
        f_g = sig[:, 1 * H:2 * H]
        g_g = 2.0 * sig[:, 2 * H:3 * H] - 1.0
        o_g = sig[:, 3 * H:4 * H]
        c = f_g * c + i_g * g_g
        h = o_g * jnp.tanh(c)

    # Final Linear on the last hidden state; lane-dense (8, 128) unmasked store.
    o_ref[...] = (jnp.dot(h.astype(jnp.bfloat16), wfc,
                          preferred_element_type=jnp.float32) + b_fc)


def prepare_params(w_ih, w_hh, b_ih, b_hh, w_fc, b_fc):
    """One-time parameter prep (hoisted out of the per-call forward path)."""
    H = w_hh.shape[1]
    I = w_ih.shape[1]
    O = w_fc.shape[0]
    G = 4 * H
    assert G % LANE == 0 and O <= G and H % BF16_SUBLANE == 0

    Ip = ((I + BF16_SUBLANE - 1) // BF16_SUBLANE) * BF16_SUBLANE   # 4 -> 16

    wih_t = w_ih.T.astype(jnp.float32)       # (I, 4H)
    whh_t = w_hh.T.astype(jnp.float32)       # (H, 4H)
    bias = (b_ih + b_hh).astype(jnp.float32) # (4H,)
    wfc_t = w_fc.T.astype(jnp.float32)       # (H, O)

    # Pre-scale g-gate columns by 2 so the kernel needs only a single sigmoid pass
    # (tanh(z) = 2*sigmoid(2z) - 1). Exact in bf16 (power-of-two scale).
    g = slice(2 * H, 3 * H)
    wih_t = wih_t.at[:, g].multiply(2.0)
    whh_t = whh_t.at[:, g].multiply(2.0)
    bias = bias.at[g].multiply(2.0)

    # Fused bf16 weight buffer; each segment starts on a 16-row boundary so the
    # in-kernel static slices never cross a bf16 (16, 128) packing tile.
    w_all = jnp.zeros((Ip + 2 * H, G), jnp.float32)
    w_all = w_all.at[:I, :].set(wih_t)
    w_all = w_all.at[Ip:Ip + H, :].set(whh_t)
    w_all = w_all.at[Ip + H:Ip + 2 * H, :O].set(wfc_t)
    w_all = w_all.astype(jnp.bfloat16)

    # Fused f32 bias buffer (kept f32: added after the f32-accumulated dots).
    b_all = jnp.zeros((2, G), jnp.float32)
    b_all = b_all.at[0, :].set(bias)
    b_all = b_all.at[1, :O].set(b_fc.astype(jnp.float32))

    return {"w_all": w_all, "b_all": b_all, "dims": (I, H, O, Ip)}


@functools.partial(jax.jit, static_argnames=("dims",))
def _forward_impl(x_btI, w_all, b_all, *, dims):
    I, H, O, Ip = dims
    B, T, _ = x_btI.shape
    Bp = max(SUBLANE, ((B + SUBLANE - 1) // SUBLANE) * SUBLANE)
    G = 4 * H

    # (B, T, I) -> time-major, batch/feature zero-padded, flattened, bf16.
    x_t = jnp.transpose(x_btI, (1, 0, 2))                      # (T, B, I)
    x_p = jnp.pad(x_t, ((0, 0), (0, Bp - B), (0, Ip - I)))     # (T, Bp, Ip)
    x_flat = x_p.reshape(T * Bp, Ip).astype(jnp.bfloat16)

    vmem = pl.BlockSpec(memory_space=pltpu.MemorySpace.VMEM)
    out_pad = pl.pallas_call(
        functools.partial(lstm_fc_kernel, T=T, Bp=Bp, H=H, Ip=Ip),
        out_shape=jax.ShapeDtypeStruct((Bp, G), jnp.float32),
        in_specs=[vmem, vmem, vmem],
        out_specs=vmem,
    )(x_flat, w_all, b_all)
    return out_pad[:B, :O]


def lstm_model_forward(x_btI, params):
    """x_btI: (B, T, I) batch_first input. Returns (B, O) like the PyTorch model."""
    return _forward_impl(x_btI, params["w_all"], params["b_all"],
                         dims=params["dims"])


def _reference_forward(x_btI, w_ih, w_hh, b_ih, b_hh, w_fc, b_fc):
    """Pure-JAX f32 reference reproducing PyTorch nn.LSTM + nn.Linear semantics."""
    B, T, I = x_btI.shape
    H = w_hh.shape[1]
    wih_t, whh_t = w_ih.T, w_hh.T
    bias = b_ih + b_hh
    h = jnp.zeros((B, H), jnp.float32)
    c = jnp.zeros((B, H), jnp.float32)
    for t in range(T):
        gates = x_btI[:, t, :] @ wih_t + h @ whh_t + bias
        i_g = jax.nn.sigmoid(gates[:, 0 * H:1 * H])
        f_g = jax.nn.sigmoid(gates[:, 1 * H:2 * H])
        g_g = jnp.tanh(gates[:, 2 * H:3 * H])
        o_g = jax.nn.sigmoid(gates[:, 3 * H:4 * H])
        c = f_g * c + i_g * g_g
        h = o_g * jnp.tanh(c)
    return h @ w_fc.T + b_fc


if __name__ == "__main__":
    B, T, I, H, O = 2, 8, 4, 32, 4

    key = jax.random.PRNGKey(0)
    k = jax.random.split(key, 7)
    bound = 1.0 / jnp.sqrt(H)

    # Deterministic parameter init (PyTorch-style uniform(-1/sqrt(H), 1/sqrt(H))).
    w_ih = jax.random.uniform(k[0], (4 * H, I), jnp.float32, -bound, bound)   # (128, 4)
    w_hh = jax.random.uniform(k[1], (4 * H, H), jnp.float32, -bound, bound)   # (128, 32)
    b_ih = jax.random.uniform(k[2], (4 * H,), jnp.float32, -bound, bound)
    b_hh = jax.random.uniform(k[3], (4 * H,), jnp.float32, -bound, bound)
    w_fc = jax.random.uniform(k[4], (O, H), jnp.float32, -bound, bound)       # (4, 32)
    b_fc = jax.random.uniform(k[5], (O,), jnp.float32, -bound, bound)

    # One-time parameter prep (transposes, g-gate scale, padding, bf16 cast, concat).
    params = prepare_params(w_ih, w_hh, b_ih, b_hh, w_fc, b_fc)

    x = jax.random.normal(k[6], (B, T, I), jnp.float32)

    out = lstm_model_forward(x, params)
    out = jax.block_until_ready(out)

    ref = _reference_forward(x, w_ih, w_hh, b_ih, b_hh, w_fc, b_fc)
    assert out.shape == (B, O)
    # bf16 MXU operands -> tolerance loosened vs. the pure-f32 reference.
    err = float(jnp.max(jnp.abs(out - ref)))
    assert jnp.allclose(out, ref, atol=2e-2, rtol=2e-2), f"max abs err {err}"

    print("KERNEL_OK")
</pallas_src>

<mosaic_0001>
module attributes {stable_mosaic.version = 11 : i64} {
  func.func @lstm_fc_kernel(%arg0: memref<64x16xbf16, #tpu.memory_space<vmem>>, %arg1: memref<80x128xbf16, #tpu.memory_space<vmem>>, %arg2: memref<2x128xf32, #tpu.memory_space<vmem>>, %arg3: memref<8x128xf32, #tpu.memory_space<vmem>>) attributes {dimension_semantics = [], scalar_prefetch = 0 : i64, scratch_operands = 0 : i64, tpu.core_type = #tpu.core_type<tc>} {
    %c0 = arith.constant 0 : index
    %c0_0 = arith.constant 0 : index
    %0 = vector.load %arg1[%c0, %c0_0] : memref<80x128xbf16, #tpu.memory_space<vmem>>, vector<16x128xbf16>
    %c16 = arith.constant 16 : index
    %c0_1 = arith.constant 0 : index
    %1 = vector.load %arg1[%c16, %c0_1] : memref<80x128xbf16, #tpu.memory_space<vmem>>, vector<32x128xbf16>
    %c48 = arith.constant 48 : index
    %c0_2 = arith.constant 0 : index
    %2 = vector.load %arg1[%c48, %c0_2] : memref<80x128xbf16, #tpu.memory_space<vmem>>, vector<32x128xbf16>
    %c0_3 = arith.constant 0 : index
    %c0_4 = arith.constant 0 : index
    %3 = vector.load %arg2[%c0_3, %c0_4] : memref<2x128xf32, #tpu.memory_space<vmem>>, vector<1x128xf32>
    %c1 = arith.constant 1 : index
    %c0_5 = arith.constant 0 : index
    %4 = vector.load %arg2[%c1, %c0_5] : memref<2x128xf32, #tpu.memory_space<vmem>>, vector<1x128xf32>
    %c0_6 = arith.constant 0 : index
    %c0_7 = arith.constant 0 : index
    %5 = vector.load %arg0[%c0_6, %c0_7] : memref<64x16xbf16, #tpu.memory_space<vmem>>, vector<64x16xbf16>
    %cst = arith.constant dense<0.000000e+00> : vector<64x128xf32>
    %6 = tpu.matmul %5, %0, %cst {dimension_numbers = #tpu.dot_dimension_numbers<[1], [0], [0], [1], [0, 0, 1, 1], [], []>} : vector<64x16xbf16>, vector<16x128xbf16>, vector<64x128xf32> -> vector<64x128xf32>
    %7 = vector.broadcast %3 : vector<1x128xf32> to vector<64x128xf32>
    %8 = arith.addf %6, %7 : vector<64x128xf32>
    %cst_8 = arith.constant 0.000000e+00 : f32
    %9 = vector.broadcast %cst_8 : f32 to vector<8x32xf32>
    %cst_9 = arith.constant 0.000000e+00 : f32
    %10 = vector.broadcast %cst_9 : f32 to vector<8x32xf32>
    %11 = vector.extract_strided_slice %8 {offsets = [0, 0], sizes = [8, 128], strides = [1, 1]} : vector<64x128xf32> to vector<8x128xf32>
    %12 = arith.truncf %9 : vector<8x32xf32> to vector<8x32xbf16>
    %cst_10 = arith.constant dense<0.000000e+00> : vector<8x128xf32>
    %13 = tpu.matmul %12, %1, %cst_10 {dimension_numbers = #tpu.dot_dimension_numbers<[1], [0], [0], [1], [0, 0, 1, 1], [], []>} : vector<8x32xbf16>, vector<32x128xbf16>, vector<8x128xf32> -> vector<8x128xf32>
    %14 = arith.addf %11, %13 : vector<8x128xf32>
    %15 = arith.negf %14 : vector<8x128xf32>
    %16 = math.exp %15 : vector<8x128xf32>
    %cst_11 = arith.constant 1.000000e+00 : f32
    %17 = vector.broadcast %cst_11 : f32 to vector<8x128xf32>
    %18 = arith.addf %17, %16 : vector<8x128xf32>
    %19 = arith.divf %17, %18 : vector<8x128xf32>
    %20 = vector.extract_strided_slice %19 {offsets = [0, 0], sizes = [8, 32], strides = [1, 1]} : vector<8x128xf32> to vector<8x32xf32>
    %21 = vector.extract_strided_slice %19 {offsets = [0, 32], sizes = [8, 32], strides = [1, 1]} : vector<8x128xf32> to vector<8x32xf32>
    %22 = vector.extract_strided_slice %19 {offsets = [0, 64], sizes = [8, 32], strides = [1, 1]} : vector<8x128xf32> to vector<8x32xf32>
    %cst_12 = arith.constant 2.000000e+00 : f32
    %23 = vector.broadcast %cst_12 : f32 to vector<8x32xf32>
    %24 = arith.mulf %23, %22 : vector<8x32xf32>
    %cst_13 = arith.constant 1.000000e+00 : f32
    %25 = vector.broadcast %cst_13 : f32 to vector<8x32xf32>
    %26 = arith.subf %24, %25 : vector<8x32xf32>
    %27 = vector.extract_strided_slice %19 {offsets = [0, 96], sizes = [8, 32], strides = [1, 1]} : vector<8x128xf32> to vector<8x32xf32>
    %28 = arith.mulf %21, %10 : vector<8x32xf32>
    %29 = arith.mulf %20, %26 : vector<8x32xf32>
    %30 = arith.addf %28, %29 : vector<8x32xf32>
    %31 = math.tanh %30 : vector<8x32xf32>
    %32 = arith.mulf %27, %31 : vector<8x32xf32>
    %33 = vector.extract_strided_slice %8 {offsets = [8, 0], sizes = [8, 128], strides = [1, 1]} : vector<64x128xf32> to vector<8x128xf32>
    %34 = arith.truncf %32 : vector<8x32xf32> to vector<8x32xbf16>
    %cst_14 = arith.constant dense<0.000000e+00> : vector<8x128xf32>
    %35 = tpu.matmul %34, %1, %cst_14 {dimension_numbers = #tpu.dot_dimension_numbers<[1], [0], [0], [1], [0, 0, 1, 1], [], []>} : vector<8x32xbf16>, vector<32x128xbf16>, vector<8x128xf32> -> vector<8x128xf32>
    %36 = arith.addf %33, %35 : vector<8x128xf32>
    %37 = arith.negf %36 : vector<8x128xf32>
    %38 = math.exp %37 : vector<8x128xf32>
    %cst_15 = arith.constant 1.000000e+00 : f32
    %39 = vector.broadcast %cst_15 : f32 to vector<8x128xf32>
    %40 = arith.addf %39, %38 : vector<8x128xf32>
    %41 = arith.divf %39, %40 : vector<8x128xf32>
    %42 = vector.extract_strided_slice %41 {offsets = [0, 0], sizes = [8, 32], strides = [1, 1]} : vector<8x128xf32> to vector<8x32xf32>
    %43 = vector.extract_strided_slice %41 {offsets = [0, 32], sizes = [8, 32], strides = [1, 1]} : vector<8x128xf32> to vector<8x32xf32>
    %44 = vector.extract_strided_slice %41 {offsets = [0, 64], sizes = [8, 32], strides = [1, 1]} : vector<8x128xf32> to vector<8x32xf32>
    %cst_16 = arith.constant 2.000000e+00 : f32
    %45 = vector.broadcast %cst_16 : f32 to vector<8x32xf32>
    %46 = arith.mulf %45, %44 : vector<8x32xf32>
    %cst_17 = arith.constant 1.000000e+00 : f32
    %47 = vector.broadcast %cst_17 : f32 to vector<8x32xf32>
    %48 = arith.subf %46, %47 : vector<8x32xf32>
    %49 = vector.extract_strided_slice %41 {offsets = [0, 96], sizes = [8, 32], strides = [1, 1]} : vector<8x128xf32> to vector<8x32xf32>
    %50 = arith.mulf %43, %30 : vector<8x32xf32>
    %51 = arith.mulf %42, %48 : vector<8x32xf32>
    %52 = arith.addf %50, %51 : vector<8x32xf32>
    %53 = math.tanh %52 : vector<8x32xf32>
    %54 = arith.mulf %49, %53 : vector<8x32xf32>
    %55 = vector.extract_strided_slice %8 {offsets = [16, 0], sizes = [8, 128], strides = [1, 1]} : vector<64x128xf32> to vector<8x128xf32>
    %56 = arith.truncf %54 : vector<8x32xf32> to vector<8x32xbf16>
    %cst_18 = arith.constant dense<0.000000e+00> : vector<8x128xf32>
    %57 = tpu.matmul %56, %1, %cst_18 {dimension_numbers = #tpu.dot_dimension_numbers<[1], [0], [0], [1], [0, 0, 1, 1], [], []>} : vector<8x32xbf16>, vector<32x128xbf16>, vector<8x128xf32> -> vector<8x128xf32>
    %58 = arith.addf %55, %57 : vector<8x128xf32>
    %59 = arith.negf %58 : vector<8x128xf32>
    %60 = math.exp %59 : vector<8x128xf32>
    %cst_19 = arith.constant 1.000000e+00 : f32
    %61 = vector.broadcast %cst_19 : f32 to vector<8x128xf32>
    %62 = arith.addf %61, %60 : vector<8x128xf32>
    %63 = arith.divf %61, %62 : vector<8x128xf32>
    %64 = vector.extract_strided_slice %63 {offsets = [0, 0], sizes = [8, 32], strides = [1, 1]} : vector<8x128xf32> to vector<8x32xf32>
    %65 = vector.extract_strided_slice %63 {offsets = [0, 32], sizes = [8, 32], strides = [1, 1]} : vector<8x128xf32> to vector<8x32xf32>
    %66 = vector.extract_strided_slice %63 {offsets = [0, 64], sizes = [8, 32], strides = [1, 1]} : vector<8x128xf32> to vector<8x32xf32>
    %cst_20 = arith.constant 2.000000e+00 : f32
    %67 = vector.broadcast %cst_20 : f32 to vector<8x32xf32>
    %68 = arith.mulf %67, %66 : vector<8x32xf32>
    %cst_21 = arith.constant 1.000000e+00 : f32
    %69 = vector.broadcast %cst_21 : f32 to vector<8x32xf32>
    %70 = arith.subf %68, %69 : vector<8x32xf32>
    %71 = vector.extract_strided_slice %63 {offsets = [0, 96], sizes = [8, 32], strides = [1, 1]} : vector<8x128xf32> to vector<8x32xf32>
    %72 = arith.mulf %65, %52 : vector<8x32xf32>
    %73 = arith.mulf %64, %70 : vector<8x32xf32>
    %74 = arith.addf %72, %73 : vector<8x32xf32>
    %75 = math.tanh %74 : vector<8x32xf32>
    %76 = arith.mulf %71, %75 : vector<8x32xf32>
    %77 = vector.extract_strided_slice %8 {offsets = [24, 0], sizes = [8, 128], strides = [1, 1]} : vector<64x128xf32> to vector<8x128xf32>
    %78 = arith.truncf %76 : vector<8x32xf32> to vector<8x32xbf16>
    %cst_22 = arith.constant dense<0.000000e+00> : vector<8x128xf32>
    %79 = tpu.matmul %78, %1, %cst_22 {dimension_numbers = #tpu.dot_dimension_numbers<[1], [0], [0], [1], [0, 0, 1, 1], [], []>} : vector<8x32xbf16>, vector<32x128xbf16>, vector<8x128xf32> -> vector<8x128xf32>
    %80 = arith.addf %77, %79 : vector<8x128xf32>
    %81 = arith.negf %80 : vector<8x128xf32>
    %82 = math.exp %81 : vector<8x128xf32>
    %cst_23 = arith.constant 1.000000e+00 : f32
    %83 = vector.broadcast %cst_23 : f32 to vector<8x128xf32>
    %84 = arith.addf %83, %82 : vector<8x128xf32>
    %85 = arith.divf %83, %84 : vector<8x128xf32>
    %86 = vector.extract_strided_slice %85 {offsets = [0, 0], sizes = [8, 32], strides = [1, 1]} : vector<8x128xf32> to vector<8x32xf32>
    %87 = vector.extract_strided_slice %85 {offsets = [0, 32], sizes = [8, 32], strides = [1, 1]} : vector<8x128xf32> to vector<8x32xf32>
    %88 = vector.extract_strided_slice %85 {offsets = [0, 64], sizes = [8, 32], strides = [1, 1]} : vector<8x128xf32> to vector<8x32xf32>
    %cst_24 = arith.constant 2.000000e+00 : f32
    %89 = vector.broadcast %cst_24 : f32 to vector<8x32xf32>
    %90 = arith.mulf %89, %88 : vector<8x32xf32>
    %cst_25 = arith.constant 1.000000e+00 : f32
    %91 = vector.broadcast %cst_25 : f32 to vector<8x32xf32>
    %92 = arith.subf %90, %91 : vector<8x32xf32>
    %93 = vector.extract_strided_slice %85 {offsets = [0, 96], sizes = [8, 32], strides = [1, 1]} : vector<8x128xf32> to vector<8x32xf32>
    %94 = arith.mulf %87, %74 : vector<8x32xf32>
    %95 = arith.mulf %86, %92 : vector<8x32xf32>
    %96 = arith.addf %94, %95 : vector<8x32xf32>
    %97 = math.tanh %96 : vector<8x32xf32>
    %98 = arith.mulf %93, %97 : vector<8x32xf32>
    %99 = vector.extract_strided_slice %8 {offsets = [32, 0], sizes = [8, 128], strides = [1, 1]} : vector<64x128xf32> to vector<8x128xf32>
    %100 = arith.truncf %98 : vector<8x32xf32> to vector<8x32xbf16>
    %cst_26 = arith.constant dense<0.000000e+00> : vector<8x128xf32>
    %101 = tpu.matmul %100, %1, %cst_26 {dimension_numbers = #tpu.dot_dimension_numbers<[1], [0], [0], [1], [0, 0, 1, 1], [], []>} : vector<8x32xbf16>, vector<32x128xbf16>, vector<8x128xf32> -> vector<8x128xf32>
    %102 = arith.addf %99, %101 : vector<8x128xf32>
    %103 = arith.negf %102 : vector<8x128xf32>
    %104 = math.exp %103 : vector<8x128xf32>
    %cst_27 = arith.constant 1.000000e+00 : f32
    %105 = vector.broadcast %cst_27 : f32 to vector<8x128xf32>
    %106 = arith.addf %105, %104 : vector<8x128xf32>
    %107 = arith.divf %105, %106 : vector<8x128xf32>
    %108 = vector.extract_strided_slice %107 {offsets = [0, 0], sizes = [8, 32], strides = [1, 1]} : vector<8x128xf32> to vector<8x32xf32>
    %109 = vector.extract_strided_slice %107 {offsets = [0, 32], sizes = [8, 32], strides = [1, 1]} : vector<8x128xf32> to vector<8x32xf32>
    %110 = vector.extract_strided_slice %107 {offsets = [0, 64], sizes = [8, 32], strides = [1, 1]} : vector<8x128xf32> to vector<8x32xf32>
    %cst_28 = arith.constant 2.000000e+00 : f32
    %111 = vector.broadcast %cst_28 : f32 to vector<8x32xf32>
    %112 = arith.mulf %111, %110 : vector<8x32xf32>
    %cst_29 = arith.constant 1.000000e+00 : f32
    %113 = vector.broadcast %cst_29 : f32 to vector<8x32xf32>
    %114 = arith.subf %112, %113 : vector<8x32xf32>
    %115 = vector.extract_strided_slice %107 {offsets = [0, 96], sizes = [8, 32], strides = [1, 1]} : vector<8x128xf32> to vector<8x32xf32>
    %116 = arith.mulf %109, %96 : vector<8x32xf32>
    %117 = arith.mulf %108, %114 : vector<8x32xf32>
    %118 = arith.addf %116, %117 : vector<8x32xf32>
    %119 = math.tanh %118 : vector<8x32xf32>
    %120 = arith.mulf %115, %119 : vector<8x32xf32>
    %121 = vector.extract_strided_slice %8 {offsets = [40, 0], sizes = [8, 128], strides = [1, 1]} : vector<64x128xf32> to vector<8x128xf32>
    %122 = arith.truncf %120 : vector<8x32xf32> to vector<8x32xbf16>
    %cst_30 = arith.constant dense<0.000000e+00> : vector<8x128xf32>
    %123 = tpu.matmul %122, %1, %cst_30 {dimension_numbers = #tpu.dot_dimension_numbers<[1], [0], [0], [1], [0, 0, 1, 1], [], []>} : vector<8x32xbf16>, vector<32x128xbf16>, vector<8x128xf32> -> vector<8x128xf32>
    %124 = arith.addf %121, %123 : vector<8x128xf32>
    %125 = arith.negf %124 : vector<8x128xf32>
    %126 = math.exp %125 : vector<8x128xf32>
    %cst_31 = arith.constant 1.000000e+00 : f32
    %127 = vector.broadcast %cst_31 : f32 to vector<8x128xf32>
    %128 = arith.addf %127, %126 : vector<8x128xf32>
    %129 = arith.divf %127, %128 : vector<8x128xf32>
    %130 = vector.extract_strided_slice %129 {offsets = [0, 0], sizes = [8, 32], strides = [1, 1]} : vector<8x128xf32> to vector<8x32xf32>
    %131 = vector.extract_strided_slice %129 {offsets = [0, 32], sizes = [8, 32], strides = [1, 1]} : vector<8x128xf32> to vector<8x32xf32>
    %132 = vector.extract_strided_slice %129 {offsets = [0, 64], sizes = [8, 32], strides = [1, 1]} : vector<8x128xf32> to vector<8x32xf32>
    %cst_32 = arith.constant 2.000000e+00 : f32
    %133 = vector.broadcast %cst_32 : f32 to vector<8x32xf32>
    %134 = arith.mulf %133, %132 : vector<8x32xf32>
    %cst_33 = arith.constant 1.000000e+00 : f32
    %135 = vector.broadcast %cst_33 : f32 to vector<8x32xf32>
    %136 = arith.subf %134, %135 : vector<8x32xf32>
    %137 = vector.extract_strided_slice %129 {offsets = [0, 96], sizes = [8, 32], strides = [1, 1]} : vector<8x128xf32> to vector<8x32xf32>
    %138 = arith.mulf %131, %118 : vector<8x32xf32>
    %139 = arith.mulf %130, %136 : vector<8x32xf32>
    %140 = arith.addf %138, %139 : vector<8x32xf32>
    %141 = math.tanh %140 : vector<8x32xf32>
    %142 = arith.mulf %137, %141 : vector<8x32xf32>
    %143 = vector.extract_strided_slice %8 {offsets = [48, 0], sizes = [8, 128], strides = [1, 1]} : vector<64x128xf32> to vector<8x128xf32>
    %144 = arith.truncf %142 : vector<8x32xf32> to vector<8x32xbf16>
    %cst_34 = arith.constant dense<0.000000e+00> : vector<8x128xf32>
    %145 = tpu.matmul %144, %1, %cst_34 {dimension_numbers = #tpu.dot_dimension_numbers<[1], [0], [0], [1], [0, 0, 1, 1], [], []>} : vector<8x32xbf16>, vector<32x128xbf16>, vector<8x128xf32> -> vector<8x128xf32>
    %146 = arith.addf %143, %145 : vector<8x128xf32>
    %147 = arith.negf %146 : vector<8x128xf32>
    %148 = math.exp %147 : vector<8x128xf32>
    %cst_35 = arith.constant 1.000000e+00 : f32
    %149 = vector.broadcast %cst_35 : f32 to vector<8x128xf32>
    %150 = arith.addf %149, %148 : vector<8x128xf32>
    %151 = arith.divf %149, %150 : vector<8x128xf32>
    %152 = vector.extract_strided_slice %151 {offsets = [0, 0], sizes = [8, 32], strides = [1, 1]} : vector<8x128xf32> to vector<8x32xf32>
    %153 = vector.extract_strided_slice %151 {offsets = [0, 32], sizes = [8, 32], strides = [1, 1]} : vector<8x128xf32> to vector<8x32xf32>
    %154 = vector.extract_strided_slice %151 {offsets = [0, 64], sizes = [8, 32], strides = [1, 1]} : vector<8x128xf32> to vector<8x32xf32>
    %cst_36 = arith.constant 2.000000e+00 : f32
    %155 = vector.broadcast %cst_36 : f32 to vector<8x32xf32>
    %156 = arith.mulf %155, %154 : vector<8x32xf32>
    %cst_37 = arith.constant 1.000000e+00 : f32
    %157 = vector.broadcast %cst_37 : f32 to vector<8x32xf32>
    %158 = arith.subf %156, %157 : vector<8x32xf32>
    %159 = vector.extract_strided_slice %151 {offsets = [0, 96], sizes = [8, 32], strides = [1, 1]} : vector<8x128xf32> to vector<8x32xf32>
    %160 = arith.mulf %153, %140 : vector<8x32xf32>
    %161 = arith.mulf %152, %158 : vector<8x32xf32>
    %162 = arith.addf %160, %161 : vector<8x32xf32>
    %163 = math.tanh %162 : vector<8x32xf32>
    %164 = arith.mulf %159, %163 : vector<8x32xf32>
    %165 = vector.extract_strided_slice %8 {offsets = [56, 0], sizes = [8, 128], strides = [1, 1]} : vector<64x128xf32> to vector<8x128xf32>
    %166 = arith.truncf %164 : vector<8x32xf32> to vector<8x32xbf16>
    %cst_38 = arith.constant dense<0.000000e+00> : vector<8x128xf32>
    %167 = tpu.matmul %166, %1, %cst_38 {dimension_numbers = #tpu.dot_dimension_numbers<[1], [0], [0], [1], [0, 0, 1, 1], [], []>} : vector<8x32xbf16>, vector<32x128xbf16>, vector<8x128xf32> -> vector<8x128xf32>
    %168 = arith.addf %165, %167 : vector<8x128xf32>
    %169 = arith.negf %168 : vector<8x128xf32>
    %170 = math.exp %169 : vector<8x128xf32>
    %cst_39 = arith.constant 1.000000e+00 : f32
    %171 = vector.broadcast %cst_39 : f32 to vector<8x128xf32>
    %172 = arith.addf %171, %170 : vector<8x128xf32>
    %173 = arith.divf %171, %172 : vector<8x128xf32>
    %174 = vector.extract_strided_slice %173 {offsets = [0, 0], sizes = [8, 32], strides = [1, 1]} : vector<8x128xf32> to vector<8x32xf32>
    %175 = vector.extract_strided_slice %173 {offsets = [0, 32], sizes = [8, 32], strides = [1, 1]} : vector<8x128xf32> to vector<8x32xf32>
    %176 = vector.extract_strided_slice %173 {offsets = [0, 64], sizes = [8, 32], strides = [1, 1]} : vector<8x128xf32> to vector<8x32xf32>
    %cst_40 = arith.constant 2.000000e+00 : f32
    %177 = vector.broadcast %cst_40 : f32 to vector<8x32xf32>
    %178 = arith.mulf %177, %176 : vector<8x32xf32>
    %cst_41 = arith.constant 1.000000e+00 : f32
    %179 = vector.broadcast %cst_41 : f32 to vector<8x32xf32>
    %180 = arith.subf %178, %179 : vector<8x32xf32>
    %181 = vector.extract_strided_slice %173 {offsets = [0, 96], sizes = [8, 32], strides = [1, 1]} : vector<8x128xf32> to vector<8x32xf32>
    %182 = arith.mulf %175, %162 : vector<8x32xf32>
    %183 = arith.mulf %174, %180 : vector<8x32xf32>
    %184 = arith.addf %182, %183 : vector<8x32xf32>
    %185 = math.tanh %184 : vector<8x32xf32>
    %186 = arith.mulf %181, %185 : vector<8x32xf32>
    %187 = arith.truncf %186 : vector<8x32xf32> to vector<8x32xbf16>
    %cst_42 = arith.constant dense<0.000000e+00> : vector<8x128xf32>
    %188 = tpu.matmul %187, %2, %cst_42 {dimension_numbers = #tpu.dot_dimension_numbers<[1], [0], [0], [1], [0, 0, 1, 1], [], []>} : vector<8x32xbf16>, vector<32x128xbf16>, vector<8x128xf32> -> vector<8x128xf32>
    %189 = vector.broadcast %4 : vector<1x128xf32> to vector<8x128xf32>
    %190 = arith.addf %188, %189 : vector<8x128xf32>
    %c0_43 = arith.constant 0 : index
    %c0_44 = arith.constant 0 : index
    %191 = vector.load %arg3[%c0_43, %c0_44] : memref<8x128xf32, #tpu.memory_space<vmem>>, vector<8x128xf32>
    tpu.vector_store %arg3[%c0_43, %c0_44], %190 {strides = array<i32>} : memref<8x128xf32, #tpu.memory_space<vmem>>, vector<8x128xf32>,
    return
  }
}

</mosaic_0001>

<llo_original>
// kernel: _forward_impl.1
$region0: #{_forward_impl.1}
  #allocation0 [shape = 'u32[]', space=smem, size = 0x4, offset = 0x4, fixed_abs, tag = 'smem constant byte address 0x4 - core index']
  #allocation1 [shape = 'u32[72,128]{1,0:T(1,128)}', space=vmem, size = 0x9000, scoped, tag = 'internal scratch']
  %s0 = inlined_call_operand.vmem [shape: bf16[64,16], index: 0, kind: input, shape index: {}]
  %s1 = inlined_call_operand.vmem [shape: bf16[80,128], index: 1, kind: input, shape index: {}]
  %s2 = inlined_call_operand.vmem [shape: f32[2,128], index: 2, kind: input, shape index: {}]
  %s3 = inlined_call_operand.vmem [shape: f32[8,128], index: 3, kind: output, shape index: {}]
  %s4 = sld [smem:[#allocation0]]
  $region22: #{_forward_impl.1} parent=0
    _
  %s6 = ssub.s32 1, %s4
  %s7 = scalar_select 0, %s6, %s4
  // Predicated region
  $region2: #{_forward_impl.1} parent=0 // pred_check
    _
  $region3: #{_forward_impl.1} parent=0 // pred_check_branch
    %9 = sbr.rel (0) target = $region5
  $region4: #{_forward_impl.1} parent=0 // pred_region
    _
  $region5: #{_forward_impl.1} parent=0 // pred_fallthru
    _
  // Predicated region
  $region6: #{_forward_impl.1} parent=0 // pred_check
    _
  $region7: #{_forward_impl.1} parent=0 // pred_check_branch
    %11 = sbr.rel (0) target = $region9
  $region8: #{_forward_impl.1} parent=0 // pred_region
    _
  $region9: #{_forward_impl.1} parent=0 // pred_fallthru
    _
  // Predicated region
  $region10: #{_forward_impl.1} parent=0 // pred_check
    _
  $region11: #{_forward_impl.1} parent=0 // pred_check_branch
    %13 = sbr.rel (0) target = $region13
  $region12: #{_forward_impl.1} parent=0 // pred_region
    _
  $region13: #{_forward_impl.1} parent=0 // pred_fallthru
    _
  %v15 = vld [vmem:[%s1] sm:$0xf]
  %v16 = vld [vmem:[%s1 + $0x4] sm:$0xf]
  %v17 = vld [vmem:[%s1 + $0x8] sm:$0xf]
  %v18 = vld [vmem:[%s1 + $0xc] sm:$0xf]
  %v19 = vld [vmem:[%s1 + $0x10] sm:$0xf]
  %v20 = vld [vmem:[%s1 + $0x14] sm:$0xf]
  %v21 = vld [vmem:[%s1 + $0x18] sm:$0xf]
  %v22 = vld [vmem:[%s1 + $0x1c] sm:$0xf]
  %v23 = vld [vmem:[%s1 + $0x20] sm:$0xf]
  %v24 = vld [vmem:[%s1 + $0x24] sm:$0xf]
  %v25 = vld [vmem:[%s2] sm:$0x1]
  %v26 = vld [vmem:[%s2 + $0x1] sm:$0x1]
  %v27 = vld [vmem:[%s0] sm:$0xf]
  %v28 = vld [vmem:[%s0 + $0x4] sm:$0xf]
  %v29 = vld [vmem:[%s0 + $0x8] sm:$0xf]
  %v30 = vld [vmem:[%s0 + $0xc] sm:$0xf]
  %v31 = vld [vmem:[%s0 + $0x10] sm:$0xf]
  %v32 = vld [vmem:[%s0 + $0x14] sm:$0xf]
  %v33 = vld [vmem:[%s0 + $0x18] sm:$0xf]
  %v34 = vld [vmem:[%s0 + $0x1c] sm:$0xf]
  %v35 = vperm.slane %v25, 0
  %v44 = vunpack.c.l.b16 %v27
  %v45 = vunpack.c.l.b16 %v28
  %v46 = vunpack.c.l.b16 %v29
  %v47 = vunpack.c.l.b16 %v30
  %v48 = vunpack.c.l.b16 %v31
  %v49 = vunpack.c.l.b16 %v32
  %v50 = vunpack.c.l.b16 %v33
  %v51 = vunpack.c.l.b16 %v34
  %v52 = vpack.c.b16 %v45, %v44
  %v53 = vpack.c.b16 %v47, %v46
  %v54 = vpack.c.b16 %v49, %v48
  %v55 = vpack.c.b16 %v51, %v50
  %v58 = vunpack.c.l.b16 %v15
  %v59 = vunpack.c.l.b16 %v16
  %v60 = vpack.c.b16 %v59, %v58
  %vm62 = vcmask 130048
  %v64 = vsel %vm62, %v52, 0
  %v67 = vsel %vm62, %v53, 0
  %v70 = vsel %vm62, %v54, 0
  %v73 = vsel %vm62, %v55, 0
  %75 = vmatpush.bf16.msra.mxu0 0
  %76 = vmatpush.bf16.msra.mxu0 0
  %77 = vmatpush.bf16.msra.mxu0 0
  %78 = vmatpush.bf16.msra.mxu0 0
  %79 = vmatpush.bf16.msra.mxu0 0
  %80 = vmatpush.bf16.msra.mxu0 0
  %81 = vmatpush.bf16.msra.mxu0 0
  %82 = vmatpush.bf16.msra.mxu0 %v60
  %83 = vmatmul.bf16.gmra.mxu0 %v64
  %v84 = vpop.f32.mrf.mxu0
  %v85 = vadd.f32 %v35, %v84
  %v86 = vpop.f32.mrf.mxu0
  %v87 = vadd.f32 %v35, %v86
  %88 = vmatmul.bf16.gmra.mxu0 %v67
  %v89 = vpop.f32.mrf.mxu0
  %v90 = vadd.f32 %v35, %v89
  %v91 = vpop.f32.mrf.mxu0
  %v92 = vadd.f32 %v35, %v91
  %93 = vmatmul.bf16.gmra.mxu0 %v70
  %v94 = vpop.f32.mrf.mxu0
  %v95 = vadd.f32 %v35, %v94
  %v96 = vpop.f32.mrf.mxu0
  %v97 = vadd.f32 %v35, %v96
  %98 = vmatmul.bf16.gmra.mxu0 %v73
  %v99 = vpop.f32.mrf.mxu0
  %v100 = vadd.f32 %v35, %v99
  %v101 = vpop.f32.mrf.mxu0
  %v102 = vadd.f32 %v35, %v101
  %103 = vdwg.mxu0
  %v108 = vunpack.c.l.b16 %v17
  %v109 = vunpack.c.l.b16 %v18
  %v110 = vunpack.c.l.b16 %v19
  %v111 = vunpack.c.l.b16 %v20
  %v112 = vpack.c.b16 %v109, %v108
  %v113 = vpack.c.b16 %v111, %v110
  %vm116 = vcmask 261120
  %v118 = vsel %vm116, 0, 0
  %120 = vmatpush.bf16.msra.mxu0 0
  %121 = vmatpush.bf16.msra.mxu0 0
  %122 = vmatpush.bf16.msra.mxu0 0
  %123 = vmatpush.bf16.msra.mxu0 0
  %124 = vmatpush.bf16.msra.mxu0 0
  %125 = vmatpush.bf16.msra.mxu0 0
  %126 = vmatpush.bf16.msra.mxu0 %v113
  %127 = vmatpush.bf16.msra.mxu0 %v112
  %128 = vmatmul.bf16.gmra.mxu0 %v118
  %v129 = vpop.f32.mrf.mxu0
  %v130 = vadd.f32 0.0, %v129
  %v131 = vpop.f32.mrf.mxu0
  %132 = vdwg.mxu0
  %v133 = vadd.f32 %v85, %v130
  %v134 = vxor.u32 %v133, 2147483648
  %v135 = vmul.f32 %v134, 1.442695
  %v136 = vpow.pop %v135
  %v137 = vadd.f32 %v136, 1.0
  %v138 = vrcp.pop %v137
  %v139 = vmul.f32 %v137, %v138
  %v140 = vsub.f32 1.0, %v139
  %v141 = vmul.f32 %v138, %v140
  %v142 = vadd.f32 %v138, %v141
  %vm143 = vweird.f32 %v137
  %vm144 = vweird.f32 %v138
  %vm145 = vmor %vm143, %vm144
  %v146 = vsel %vm145, %v138, %v142
  %v147 = vand.u32 2147483647, %v137
  %vm148 = vcmp.eq.f32.partialorder %v147, 8.507059e+37
  %v149 = vand.u32 %v137, 2147483648
  %v150 = vor.u32 1.1754944e-38, %v149
  %v151 = vsel %vm148, %v150, %v146
  %v152 = vmul.f32 1.0, %v151
  %v153 = vmul.f32 %v152, 2.0
  %v154 = vsub.f32 %v153, 1.0
  %v155 = vmul.f32 %v152, 0.0
  %157 = vrot.lane.b32.xlu0 %v154, 64
  %v158 = vpop.permute.xlu0 %157
  %v160 = vmul.f32 %v152, %v158
  %162 = vrot.lane.b32.xlu0 %v160, 32
  %v163 = vpop.permute.xlu0 %162
  %v165 = vadd.f32 %v155, %v163
  %v166 = vtanh.pop %v165
  %168 = vrot.lane.b32.xlu0 %v166, 64
  %v169 = vpop.permute.xlu0 %168
  %v171 = vmul.f32 %v152, %v169
  %v172 = vpack.c.bf16 %v171, %v171
  %174 = vrot.lane.b32.xlu0 %v172, 32
  %v175 = vpop.permute.xlu0 %174
  %v177 = vsel %vm116, %v175, 0
  %179 = vmatpush.bf16.msra.mxu0 0
  %180 = vmatpush.bf16.msra.mxu0 0
  %181 = vmatpush.bf16.msra.mxu0 0
  %182 = vmatpush.bf16.msra.mxu0 0
  %183 = vmatpush.bf16.msra.mxu0 0
  %184 = vmatpush.bf16.msra.mxu0 0
  %185 = vmatpush.bf16.msra.mxu0 %v113
  %186 = vmatpush.bf16.msra.mxu0 %v112
  %187 = vmatmul.bf16.gmra.mxu0 %v177
  %v188 = vpop.f32.mrf.mxu0
  %v189 = vadd.f32 0.0, %v188
  %v190 = vpop.f32.mrf.mxu0
  %191 = vdwg.mxu0
  %v192 = vadd.f32 %v87, %v189
  %v193 = vxor.u32 %v192, 2147483648
  %v194 = vmul.f32 %v193, 1.442695
  %v195 = vpow.pop %v194
  %v196 = vadd.f32 %v195, 1.0
  %v197 = vrcp.pop %v196
  %v198 = vmul.f32 %v196, %v197
  %v199 = vsub.f32 1.0, %v198
  %v200 = vmul.f32 %v197, %v199
  %v201 = vadd.f32 %v197, %v200
  %vm202 = vweird.f32 %v196
  %vm203 = vweird.f32 %v197
  %vm204 = vmor %vm202, %vm203
  %v205 = vsel %vm204, %v197, %v201
  %v206 = vand.u32 2147483647, %v196
  %vm207 = vcmp.eq.f32.partialorder %v206, 8.507059e+37
  %v208 = vand.u32 %v196, 2147483648
  %v209 = vor.u32 1.1754944e-38, %v208
  %v210 = vsel %vm207, %v209, %v205
  %v211 = vmul.f32 1.0, %v210
  %v212 = vmul.f32 %v211, 2.0
  %v213 = vsub.f32 %v212, 1.0
  %v214 = vmul.f32 %v211, %v165
  %216 = vrot.lane.b32.xlu0 %v213, 64
  %v217 = vpop.permute.xlu0 %216
  %v219 = vmul.f32 %v211, %v217
  %221 = vrot.lane.b32.xlu0 %v219, 32
  %v222 = vpop.permute.xlu0 %221
  %v224 = vadd.f32 %v214, %v222
  %v225 = vtanh.pop %v224
  %227 = vrot.lane.b32.xlu0 %v225, 64
  %v228 = vpop.permute.xlu0 %227
  %v230 = vmul.f32 %v211, %v228
  %v231 = vpack.c.bf16 %v230, %v230
  %233 = vrot.lane.b32.xlu0 %v231, 32
  %v234 = vpop.permute.xlu0 %233
  %v236 = vsel %vm116, %v234, 0
  %238 = vmatpush.bf16.msra.mxu0 0
  %239 = vmatpush.bf16.msra.mxu0 0
  %240 = vmatpush.bf16.msra.mxu0 0
  %241 = vmatpush.bf16.msra.mxu0 0
  %242 = vmatpush.bf16.msra.mxu0 0
  %243 = vmatpush.bf16.msra.mxu0 0
  %244 = vmatpush.bf16.msra.mxu0 %v113
  %245 = vmatpush.bf16.msra.mxu0 %v112
  %246 = vmatmul.bf16.gmra.mxu0 %v236
  %v247 = vpop.f32.mrf.mxu0
  %v248 = vadd.f32 0.0, %v247
  %v249 = vpop.f32.mrf.mxu0
  %250 = vdwg.mxu0
  %v251 = vadd.f32 %v90, %v248
  %v252 = vxor.u32 %v251, 2147483648
  %v253 = vmul.f32 %v252, 1.442695
  %v254 = vpow.pop %v253
  %v255 = vadd.f32 %v254, 1.0
  %v256 = vrcp.pop %v255
  %v257 = vmul.f32 %v255, %v256
  %v258 = vsub.f32 1.0, %v257
  %v259 = vmul.f32 %v256, %v258
  %v260 = vadd.f32 %v256, %v259
  %vm261 = vweird.f32 %v255
  %vm262 = vweird.f32 %v256
  %vm263 = vmor %vm261, %vm262
  %v264 = vsel %vm263, %v256, %v260
  %v265 = vand.u32 2147483647, %v255
  %vm266 = vcmp.eq.f32.partialorder %v265, 8.507059e+37
  %v267 = vand.u32 %v255, 2147483648
  %v268 = vor.u32 1.1754944e-38, %v267
  %v269 = vsel %vm266, %v268, %v264
  %v270 = vmul.f32 1.0, %v269
  %v271 = vmul.f32 %v270, 2.0
  %v272 = vsub.f32 %v271, 1.0
  %v273 = vmul.f32 %v270, %v224
  %275 = vrot.lane.b32.xlu0 %v272, 64
  %v276 = vpop.permute.xlu0 %275
  %v278 = vmul.f32 %v270, %v276
  %280 = vrot.lane.b32.xlu0 %v278, 32
  %v281 = vpop.permute.xlu0 %280
  %v283 = vadd.f32 %v273, %v281
  %v284 = vtanh.pop %v283
  %286 = vrot.lane.b32.xlu0 %v284, 64
  %v287 = vpop.permute.xlu0 %286
  %v289 = vmul.f32 %v270, %v287
  %v290 = vpack.c.bf16 %v289, %v289
  %292 = vrot.lane.b32.xlu0 %v290, 32
  %v293 = vpop.permute.xlu0 %292
  %v295 = vsel %vm116, %v293, 0
  %297 = vmatpush.bf16.msra.mxu0 0
  %298 = vmatpush.bf16.msra.mxu0 0
  %299 = vmatpush.bf16.msra.mxu0 0
  %300 = vmatpush.bf16.msra.mxu0 0
  %301 = vmatpush.bf16.msra.mxu0 0
  %302 = vmatpush.bf16.msra.mxu0 0
  %303 = vmatpush.bf16.msra.mxu0 %v113
  %304 = vmatpush.bf16.msra.mxu0 %v112
  %305 = vmatmul.bf16.gmra.mxu0 %v295
  %v306 = vpop.f32.mrf.mxu0
  %v307 = vadd.f32 0.0, %v306
  %v308 = vpop.f32.mrf.mxu0
  %309 = vdwg.mxu0
  %v310 = vadd.f32 %v92, %v307
  %v311 = vxor.u32 %v310, 2147483648
  %v312 = vmul.f32 %v311, 1.442695
  %v313 = vpow.pop %v312
  %v314 = vadd.f32 %v313, 1.0
  %v315 = vrcp.pop %v314
  %v316 = vmul.f32 %v314, %v315
  %v317 = vsub.f32 1.0, %v316
  %v318 = vmul.f32 %v315, %v317
  %v319 = vadd.f32 %v315, %v318
  %vm320 = vweird.f32 %v314
  %vm321 = vweird.f32 %v315
  %vm322 = vmor %vm320, %vm321
  %v323 = vsel %vm322, %v315, %v319
  %v324 = vand.u32 2147483647, %v314
  %vm325 = vcmp.eq.f32.partialorder %v324, 8.507059e+37
  %v326 = vand.u32 %v314, 2147483648
  %v327 = vor.u32 1.1754944e-38, %v326
  %v328 = vsel %vm325, %v327, %v323
  %v329 = vmul.f32 1.0, %v328
  %v330 = vmul.f32 %v329, 2.0
  %v331 = vsub.f32 %v330, 1.0
  %v332 = vmul.f32 %v329, %v283
  %334 = vrot.lane.b32.xlu0 %v331, 64
  %v335 = vpop.permute.xlu0 %334
  %v337 = vmul.f32 %v329, %v335
  %339 = vrot.lane.b32.xlu0 %v337, 32
  %v340 = vpop.permute.xlu0 %339
  %v342 = vadd.f32 %v332, %v340
  %v343 = vtanh.pop %v342
  %345 = vrot.lane.b32.xlu0 %v343, 64
  %v346 = vpop.permute.xlu0 %345
  %v348 = vmul.f32 %v329, %v346
  %v349 = vpack.c.bf16 %v348, %v348
  %351 = vrot.lane.b32.xlu0 %v349, 32
  %v352 = vpop.permute.xlu0 %351
  %v354 = vsel %vm116, %v352, 0
  %356 = vmatpush.bf16.msra.mxu0 0
  %357 = vmatpush.bf16.msra.mxu0 0
  %358 = vmatpush.bf16.msra.mxu0 0
  %359 = vmatpush.bf16.msra.mxu0 0
  %360 = vmatpush.bf16.msra.mxu0 0
  %361 = vmatpush.bf16.msra.mxu0 0
  %362 = vmatpush.bf16.msra.mxu0 %v113
  %363 = vmatpush.bf16.msra.mxu0 %v112
  %364 = vmatmul.bf16.gmra.mxu0 %v354
  %v365 = vpop.f32.mrf.mxu0
  %v366 = vadd.f32 0.0, %v365
  %v367 = vpop.f32.mrf.mxu0
  %368 = vdwg.mxu0
  %v369 = vadd.f32 %v95, %v366
  %v370 = vxor.u32 %v369, 2147483648
  %v371 = vmul.f32 %v370, 1.442695
  %v372 = vpow.pop %v371
  %v373 = vadd.f32 %v372, 1.0
  %v374 = vrcp.pop %v373
  %v375 = vmul.f32 %v373, %v374
  %v376 = vsub.f32 1.0, %v375
  %v377 = vmul.f32 %v374, %v376
  %v378 = vadd.f32 %v374, %v377
  %vm379 = vweird.f32 %v373
  %vm380 = vweird.f32 %v374
  %vm381 = vmor %vm379, %vm380
  %v382 = vsel %vm381, %v374, %v378
  %v383 = vand.u32 2147483647, %v373
  %vm384 = vcmp.eq.f32.partialorder %v383, 8.507059e+37
  %v385 = vand.u32 %v373, 2147483648
  %v386 = vor.u32 1.1754944e-38, %v385
  %v387 = vsel %vm384, %v386, %v382
  %v388 = vmul.f32 1.0, %v387
  %v389 = vmul.f32 %v388, 2.0
  %v390 = vsub.f32 %v389, 1.0
  %v391 = vmul.f32 %v388, %v342
  %393 = vrot.lane.b32.xlu0 %v390, 64
  %v394 = vpop.permute.xlu0 %393
  %v396 = vmul.f32 %v388, %v394
  %398 = vrot.lane.b32.xlu0 %v396, 32
  %v399 = vpop.permute.xlu0 %398
  %v401 = vadd.f32 %v391, %v399
  %v402 = vtanh.pop %v401
  %404 = vrot.lane.b32.xlu0 %v402, 64
  %v405 = vpop.permute.xlu0 %404
  %v407 = vmul.f32 %v388, %v405
  %v408 = vpack.c.bf16 %v407, %v407
  %410 = vrot.lane.b32.xlu0 %v408, 32
  %v411 = vpop.permute.xlu0 %410
  %v413 = vsel %vm116, %v411, 0
  %415 = vmatpush.bf16.msra.mxu0 0
  %416 = vmatpush.bf16.msra.mxu0 0
  %417 = vmatpush.bf16.msra.mxu0 0
  %418 = vmatpush.bf16.msra.mxu0 0
  %419 = vmatpush.bf16.msra.mxu0 0
  %420 = vmatpush.bf16.msra.mxu0 0
  %421 = vmatpush.bf16.msra.mxu0 %v113
  %422 = vmatpush.bf16.msra.mxu0 %v112
  %423 = vmatmul.bf16.gmra.mxu0 %v413
  %v424 = vpop.f32.mrf.mxu0
  %v425 = vadd.f32 0.0, %v424
  %v426 = vpop.f32.mrf.mxu0
  %427 = vdwg.mxu0
  %v428 = vadd.f32 %v97, %v425
  %v429 = vxor.u32 %v428, 2147483648
  %v430 = vmul.f32 %v429, 1.442695
  %v431 = vpow.pop %v430
  %v432 = vadd.f32 %v431, 1.0
  %v433 = vrcp.pop %v432
  %v434 = vmul.f32 %v432, %v433
  %v435 = vsub.f32 1.0, %v434
  %v436 = vmul.f32 %v433, %v435
  %v437 = vadd.f32 %v433, %v436
  %vm438 = vweird.f32 %v432
  %vm439 = vweird.f32 %v433
  %vm440 = vmor %vm438, %vm439
  %v441 = vsel %vm440, %v433, %v437
  %v442 = vand.u32 2147483647, %v432
  %vm443 = vcmp.eq.f32.partialorder %v442, 8.507059e+37
  %v444 = vand.u32 %v432, 2147483648
  %v445 = vor.u32 1.1754944e-38, %v444
  %v446 = vsel %vm443, %v445, %v441
  %v447 = vmul.f32 1.0, %v446
  %v448 = vmul.f32 %v447, 2.0
  %v449 = vsub.f32 %v448, 1.0
  %v450 = vmul.f32 %v447, %v401
  %452 = vrot.lane.b32.xlu0 %v449, 64
  %v453 = vpop.permute.xlu0 %452
  %v455 = vmul.f32 %v447, %v453
  %457 = vrot.lane.b32.xlu0 %v455, 32
  %v458 = vpop.permute.xlu0 %457
  %v460 = vadd.f32 %v450, %v458
  %v461 = vtanh.pop %v460
  %463 = vrot.lane.b32.xlu0 %v461, 64
  %v464 = vpop.permute.xlu0 %463
  %v466 = vmul.f32 %v447, %v464
  %v467 = vpack.c.bf16 %v466, %v466
  %469 = vrot.lane.b32.xlu0 %v467, 32
  %v470 = vpop.permute.xlu0 %469
  %v472 = vsel %vm116, %v470, 0
  %474 = vmatpush.bf16.msra.mxu0 0
  %475 = vmatpush.bf16.msra.mxu0 0
  %476 = vmatpush.bf16.msra.mxu0 0
  %477 = vmatpush.bf16.msra.mxu0 0
  %478 = vmatpush.bf16.msra.mxu0 0
  %479 = vmatpush.bf16.msra.mxu0 0
  %480 = vmatpush.bf16.msra.mxu0 %v113
  %481 = vmatpush.bf16.msra.mxu0 %v112
  %482 = vmatmul.bf16.gmra.mxu0 %v472
  %v483 = vpop.f32.mrf.mxu0
  %v484 = vadd.f32 0.0, %v483
  %v485 = vpop.f32.mrf.mxu0
  %486 = vdwg.mxu0
  %v487 = vadd.f32 %v100, %v484
  %v488 = vxor.u32 %v487, 2147483648
  %v489 = vmul.f32 %v488, 1.442695
  %v490 = vpow.pop %v489
  %v491 = vadd.f32 %v490, 1.0
  %v492 = vrcp.pop %v491
  %v493 = vmul.f32 %v491, %v492
  %v494 = vsub.f32 1.0, %v493
  %v495 = vmul.f32 %v492, %v494
  %v496 = vadd.f32 %v492, %v495
  %vm497 = vweird.f32 %v491
  %vm498 = vweird.f32 %v492
  %vm499 = vmor %vm497, %vm498
  %v500 = vsel %vm499, %v492, %v496
  %v501 = vand.u32 2147483647, %v491
  %vm502 = vcmp.eq.f32.partialorder %v501, 8.507059e+37
  %v503 = vand.u32 %v491, 2147483648
  %v504 = vor.u32 1.1754944e-38, %v503
  %v505 = vsel %vm502, %v504, %v500
  %v506 = vmul.f32 1.0, %v505
  %v507 = vmul.f32 %v506, 2.0
  %v508 = vsub.f32 %v507, 1.0
  %v509 = vmul.f32 %v506, %v460
  %511 = vrot.lane.b32.xlu0 %v508, 64
  %v512 = vpop.permute.xlu0 %511
  %v514 = vmul.f32 %v506, %v512
  %516 = vrot.lane.b32.xlu0 %v514, 32
  %v517 = vpop.permute.xlu0 %516
  %v519 = vadd.f32 %v509, %v517
  %v520 = vtanh.pop %v519
  %522 = vrot.lane.b32.xlu0 %v520, 64
  %v523 = vpop.permute.xlu0 %522
  %v525 = vmul.f32 %v506, %v523
  %v526 = vpack.c.bf16 %v525, %v525
  %528 = vrot.lane.b32.xlu0 %v526, 32
  %v529 = vpop.permute.xlu0 %528
  %v531 = vsel %vm116, %v529, 0
  %533 = vmatpush.bf16.msra.mxu0 0
  %534 = vmatpush.bf16.msra.mxu0 0
  %535 = vmatpush.bf16.msra.mxu0 0
  %536 = vmatpush.bf16.msra.mxu0 0
  %537 = vmatpush.bf16.msra.mxu0 0
  %538 = vmatpush.bf16.msra.mxu0 0
  %539 = vmatpush.bf16.msra.mxu0 %v113
  %540 = vmatpush.bf16.msra.mxu0 %v112
  %541 = vmatmul.bf16.gmra.mxu0 %v531
  %v542 = vpop.f32.mrf.mxu0
  %v543 = vadd.f32 0.0, %v542
  %v544 = vpop.f32.mrf.mxu0
  %545 = vdwg.mxu0
  %v546 = vadd.f32 %v102, %v543
  %v547 = vxor.u32 %v546, 2147483648
  %v548 = vmul.f32 %v547, 1.442695
  %v549 = vpow.pop %v548
  %v550 = vadd.f32 %v549, 1.0
  %v551 = vrcp.pop %v550
  %v552 = vmul.f32 %v550, %v551
  %v553 = vsub.f32 1.0, %v552
  %v554 = vmul.f32 %v551, %v553
  %v555 = vadd.f32 %v551, %v554
  %vm556 = vweird.f32 %v550
  %vm557 = vweird.f32 %v551
  %vm558 = vmor %vm556, %vm557
  %v559 = vsel %vm558, %v551, %v555
  %v560 = vand.u32 2147483647, %v550
  %vm561 = vcmp.eq.f32.partialorder %v560, 8.507059e+37
  %v562 = vand.u32 %v550, 2147483648
  %v563 = vor.u32 1.1754944e-38, %v562
  %v564 = vsel %vm561, %v563, %v559
  %v565 = vmul.f32 1.0, %v564
  %v566 = vmul.f32 %v565, 2.0
  %v567 = vsub.f32 %v566, 1.0
  %v568 = vmul.f32 %v565, %v519
  %570 = vrot.lane.b32.xlu0 %v567, 64
  %v571 = vpop.permute.xlu0 %570
  %v573 = vmul.f32 %v565, %v571
  %575 = vrot.lane.b32.xlu0 %v573, 32
  %v576 = vpop.permute.xlu0 %575
  %v578 = vadd.f32 %v568, %v576
  %v579 = vtanh.pop %v578
  %581 = vrot.lane.b32.xlu0 %v579, 64
  %v582 = vpop.permute.xlu0 %581
  %v584 = vmul.f32 %v565, %v582
  %v585 = vpack.c.bf16 %v584, %v584
  %v586 = vperm.slane %v26, 0
  %588 = vrot.lane.b32.xlu0 %v585, 32
  %v589 = vpop.permute.xlu0 %588
  %v594 = vunpack.c.l.b16 %v21
  %v595 = vunpack.c.l.b16 %v22
  %v596 = vunpack.c.l.b16 %v23
  %v597 = vunpack.c.l.b16 %v24
  %v598 = vpack.c.b16 %v595, %v594
  %v599 = vpack.c.b16 %v597, %v596
  %v603 = vsel %vm116, %v589, 0
  %605 = vmatpush.bf16.msra.mxu0 0
  %606 = vmatpush.bf16.msra.mxu0 0
  %607 = vmatpush.bf16.msra.mxu0 0
  %608 = vmatpush.bf16.msra.mxu0 0
  %609 = vmatpush.bf16.msra.mxu0 0
  %610 = vmatpush.bf16.msra.mxu0 0
  %611 = vmatpush.bf16.msra.mxu0 %v599
  %612 = vmatpush.bf16.msra.mxu0 %v598
  %613 = vmatmul.bf16.gmra.mxu0 %v603
  %v614 = vpop.f32.mrf.mxu0
  %v615 = vadd.f32 %v586, %v614
  %v616 = vpop.f32.mrf.mxu0
  %617 = vdwg.mxu0
  %618 = vst [vmem:[%s3] sm:$0xff] %v615
  // Predicated region
  $region14: #{_forward_impl.1} parent=0 // pred_check
    _
  $region15: #{_forward_impl.1} parent=0 // pred_check_branch
    %620 = sbr.rel (0) target = $region17
  $region16: #{_forward_impl.1} parent=0 // pred_region
    _
  $region17: #{_forward_impl.1} parent=0 // pred_fallthru
    _
  // Predicated region
  $region18: #{_forward_impl.1} parent=0 // pred_check
    _
  $region19: #{_forward_impl.1} parent=0 // pred_check_branch
    %622 = sbr.rel (0) target = $region21
  $region20: #{_forward_impl.1} parent=0 // pred_region
    _
  $region21: #{_forward_impl.1} parent=0 // pred_fallthru
    _

</llo_original>
